<compile_context>
chip_gen: v7x
topology: tpu7x:2x2x1
jax: 0.10.0
libtpu: 0.0.40
codegen_flags: <defaults>
</compile_context>

<pallas_src>
import functools

import jax
import jax.numpy as jnp
from jax.experimental import pallas as pl
from jax.experimental.pallas import tpu as pltpu


def _round_up(x, m):
    return ((x + m - 1) // m) * m


def mlp_kernel(x_ref, w1_ref, b1_ref, w2_ref, b2_ref, w3_ref, b3_ref, o_ref,
               *, use_bf16):
    cdt = jnp.bfloat16 if use_bf16 else jnp.float32

    # --- linear1 + relu ---  (MXU contraction, f32 accumulate; bias in f32)
    h = jnp.dot(x_ref[...].astype(cdt), w1_ref[...].astype(cdt),
                preferred_element_type=jnp.float32)
    h = jnp.maximum(h + b1_ref[...], 0.0)
    # --- linear2 + relu ---
    h = jnp.dot(h.astype(cdt), w2_ref[...].astype(cdt),
                preferred_element_type=jnp.float32)
    h = jnp.maximum(h + b2_ref[...], 0.0)
    # --- linear3 + relu ---
    h = jnp.dot(h.astype(cdt), w3_ref[...].astype(cdt),
                preferred_element_type=jnp.float32)
    h = jnp.maximum(h + b3_ref[...], 0.0)

    # --- softmax over the (unpadded) output features ---
    m = jnp.max(h, axis=-1, keepdims=True)
    e = jnp.exp(h - m)
    denom = jnp.sum(e, axis=-1, keepdims=True)
    if use_bf16:
        inv = pl.reciprocal(denom, approx=True)   # EUP slot, essentially free
    else:
        inv = 1.0 / denom                         # exact on the f32 path
    o_ref[...] = (e * inv).astype(o_ref.dtype)


@functools.partial(jax.jit, static_argnames=("block_b", "use_bf16"))
def mlp_forward(x, params, block_b=1024, use_bf16=True):
    w1, b1, w2, b2, w3, b3 = params
    B, D_in = x.shape
    H1 = w1.shape[1]     # 256
    H2 = w2.shape[1]     # 32
    D_out = w3.shape[1]

    SUB = 8  # sublane granularity for the f32 batch dimension

    # Batch tile: as large as block_b, but split into >= 2 grid steps whenever
    # the batch is big enough (megacore / v7x two-TensorCore sharding) while
    # keeping padding waste small.
    B_ru = _round_up(B, SUB)
    bb = min(block_b, B_ru)
    if B_ru >= 2 * SUB and B_ru // bb < 2:
        bb = _round_up(B_ru // 2, SUB)
    B_p = _round_up(B_ru, bb)

    xp = x if B_p == B else jnp.pad(x, ((0, B_p - B), (0, 0)))

    grid = (B_p // bb,)

    in_specs = [
        pl.BlockSpec((bb, D_in), lambda i: (i, 0)),    # x tile (natural D_in)
        pl.BlockSpec((D_in, H1), lambda i: (0, 0)),    # w1 (fetched once)
        pl.BlockSpec((1, H1), lambda i: (0, 0)),       # b1
        pl.BlockSpec((H1, H2), lambda i: (0, 0)),      # w2
        pl.BlockSpec((1, H2), lambda i: (0, 0)),       # b2
        pl.BlockSpec((H2, D_out), lambda i: (0, 0)),   # w3
        pl.BlockSpec((1, D_out), lambda i: (0, 0)),    # b3
    ]
    out_spec = pl.BlockSpec((bb, D_out), lambda i: (i, 0))

    weight_bytes = sum(int(a.size) * a.dtype.itemsize
                       for a in (w1, b1, w2, b2, w3, b3))
    cost = pl.CostEstimate(
        flops=2 * B_p * (D_in * H1 + H1 * H2 + H2 * D_out),
        transcendentals=B_p * D_out,
        bytes_accessed=int(xp.size) * xp.dtype.itemsize + weight_bytes
        + B_p * D_out * 4,
    )

    out = pl.pallas_call(
        functools.partial(mlp_kernel, use_bf16=use_bf16),
        out_shape=jax.ShapeDtypeStruct((B_p, D_out), jnp.float32),
        grid=grid,
        in_specs=in_specs,
        out_specs=out_spec,
        compiler_params=pltpu.CompilerParams(
            dimension_semantics=("parallel",),
            vmem_limit_bytes=32 * 1024 * 1024),
        cost_estimate=cost,
    )(xp, w1, b1, w2, b2, w3, b3)

    return out if B_p == B else out[:B]


def init_params(key, input_dim, output_dim):
    """Deterministic synthetic init (PyTorch nn.Linear-style uniform ranges)."""
    dims = [(input_dim, 256), (256, 32), (32, output_dim)]
    params = []
    for fan_in, fan_out in dims:
        kw, kb, key = jax.random.split(key, 3)
        bound = 1.0 / (fan_in ** 0.5)
        w = jax.random.uniform(kw, (fan_in, fan_out), jnp.float32, -bound, bound)
        b = jax.random.uniform(kb, (1, fan_out), jnp.float32, -bound, bound)
        params += [w, b]
    return tuple(params)


def mlp_reference(x, params):
    """Plain-JAX f32 reference for correctness check."""
    w1, b1, w2, b2, w3, b3 = params
    h = jax.nn.relu(x @ w1 + b1)
    h = jax.nn.relu(h @ w2 + b2)
    h = jax.nn.relu(h @ w3 + b3)
    return jax.nn.softmax(h, axis=-1)


if __name__ == "__main__":
    key = jax.random.PRNGKey(0)
    kx, kp = jax.random.split(key)

    batch, input_dim, output_dim = 8, 64, 16
    x = jax.random.normal(kx, (batch, input_dim), jnp.float32)
    params = init_params(kp, input_dim, output_dim)

    ref = mlp_reference(x, params)

    # f32 path: exact divide in the softmax, tight tolerance.
    out_f32 = jax.block_until_ready(mlp_forward(x, params, use_bf16=False))
    assert out_f32.shape == (batch, output_dim)
    assert jnp.allclose(out_f32, ref, atol=1e-3, rtol=1e-3), "f32 mismatch"

    # bf16-MXU path (default): looser tolerance for reduced-precision matmuls.
    out_bf16 = jax.block_until_ready(mlp_forward(x, params))
    assert out_bf16.shape == (batch, output_dim)
    assert jnp.allclose(out_bf16, ref, atol=2e-2, rtol=2e-2), "bf16 mismatch"

    print("KERNEL_OK")
</pallas_src>

<mosaic_0001>
module attributes {stable_mosaic.version = 11 : i64} {
  func.func @mlp_kernel(%arg0: i32, %arg1: memref<8x64xf32, #tpu.memory_space<vmem>>, %arg2: memref<64x256xf32, #tpu.memory_space<vmem>>, %arg3: memref<1x256xf32, #tpu.memory_space<vmem>>, %arg4: memref<256x32xf32, #tpu.memory_space<vmem>>, %arg5: memref<1x32xf32, #tpu.memory_space<vmem>>, %arg6: memref<32x16xf32, #tpu.memory_space<vmem>>, %arg7: memref<1x16xf32, #tpu.memory_space<vmem>>, %arg8: memref<8x16xf32, #tpu.memory_space<vmem>>) attributes {dimension_semantics = [#tpu.dimension_semantics<parallel>], iteration_bounds = array<i64: 1>, scalar_prefetch = 0 : i64, scratch_operands = 0 : i64, tpu.core_type = #tpu.core_type<tc>, window_params = [{transform_indices = @transform_0, window_bounds = array<i64: 8, 64>}, {pipeline_mode = #tpu.pipeline_mode<synchronous>, transform_indices = @transform_1, window_bounds = array<i64: 64, 256>}, {pipeline_mode = #tpu.pipeline_mode<synchronous>, transform_indices = @transform_2, window_bounds = array<i64: 1, 256>}, {pipeline_mode = #tpu.pipeline_mode<synchronous>, transform_indices = @transform_3, window_bounds = array<i64: 256, 32>}, {pipeline_mode = #tpu.pipeline_mode<synchronous>, transform_indices = @transform_4, window_bounds = array<i64: 1, 32>}, {pipeline_mode = #tpu.pipeline_mode<synchronous>, transform_indices = @transform_5, window_bounds = array<i64: 32, 16>}, {pipeline_mode = #tpu.pipeline_mode<synchronous>, transform_indices = @transform_6, window_bounds = array<i64: 1, 16>}, {transform_indices = @transform_7, window_bounds = array<i64: 8, 16>}]} {
    %c0 = arith.constant 0 : index
    %c0_0 = arith.constant 0 : index
    %0 = vector.load %arg1[%c0, %c0_0] : memref<8x64xf32, #tpu.memory_space<vmem>>, vector<8x64xf32>
    %c0_1 = arith.constant 0 : index
    %c0_2 = arith.constant 0 : index
    %1 = vector.load %arg2[%c0_1, %c0_2] : memref<64x256xf32, #tpu.memory_space<vmem>>, vector<64x256xf32>
    %cst = arith.constant dense<0.000000e+00> : vector<8x256xf32>
    %2 = tpu.matmul %0, %1, %cst {dimension_numbers = #tpu.dot_dimension_numbers<[1], [0], [0], [1], [0, 0, 1, 1], [], []>} : vector<8x64xf32>, vector<64x256xf32>, vector<8x256xf32> -> vector<8x256xf32>
    %c0_3 = arith.constant 0 : index
    %c0_4 = arith.constant 0 : index
    %3 = vector.load %arg3[%c0_3, %c0_4] : memref<1x256xf32, #tpu.memory_space<vmem>>, vector<1x256xf32>
    %4 = vector.broadcast %3 : vector<1x256xf32> to vector<8x256xf32>
    %5 = arith.addf %2, %4 : vector<8x256xf32>
    %cst_5 = arith.constant 0.000000e+00 : f32
    %6 = vector.broadcast %cst_5 : f32 to vector<8x256xf32>
    %7 = arith.maximumf %5, %6 : vector<8x256xf32>
    %c0_6 = arith.constant 0 : index
    %c0_7 = arith.constant 0 : index
    %8 = vector.load %arg4[%c0_6, %c0_7] : memref<256x32xf32, #tpu.memory_space<vmem>>, vector<256x32xf32>
    %cst_8 = arith.constant dense<0.000000e+00> : vector<8x32xf32>
    %9 = tpu.matmul %7, %8, %cst_8 {dimension_numbers = #tpu.dot_dimension_numbers<[1], [0], [0], [1], [0, 0, 1, 1], [], []>} : vector<8x256xf32>, vector<256x32xf32>, vector<8x32xf32> -> vector<8x32xf32>
    %c0_9 = arith.constant 0 : index
    %c0_10 = arith.constant 0 : index
    %10 = vector.load %arg5[%c0_9, %c0_10] : memref<1x32xf32, #tpu.memory_space<vmem>>, vector<1x32xf32>
    %11 = vector.broadcast %10 : vector<1x32xf32> to vector<8x32xf32>
    %12 = arith.addf %9, %11 : vector<8x32xf32>
    %cst_11 = arith.constant 0.000000e+00 : f32
    %13 = vector.broadcast %cst_11 : f32 to vector<8x32xf32>
    %14 = arith.maximumf %12, %13 : vector<8x32xf32>
    %c0_12 = arith.constant 0 : index
    %c0_13 = arith.constant 0 : index
    %15 = vector.load %arg6[%c0_12, %c0_13] : memref<32x16xf32, #tpu.memory_space<vmem>>, vector<32x16xf32>
    %cst_14 = arith.constant dense<0.000000e+00> : vector<8x16xf32>
    %16 = tpu.matmul %14, %15, %cst_14 {dimension_numbers = #tpu.dot_dimension_numbers<[1], [0], [0], [1], [0, 0, 1, 1], [], []>} : vector<8x32xf32>, vector<32x16xf32>, vector<8x16xf32> -> vector<8x16xf32>
    %c0_15 = arith.constant 0 : index
    %c0_16 = arith.constant 0 : index
    %17 = vector.load %arg7[%c0_15, %c0_16] : memref<1x16xf32, #tpu.memory_space<vmem>>, vector<1x16xf32>
    %18 = vector.broadcast %17 : vector<1x16xf32> to vector<8x16xf32>
    %19 = arith.addf %16, %18 : vector<8x16xf32>
    %cst_17 = arith.constant 0.000000e+00 : f32
    %20 = vector.broadcast %cst_17 : f32 to vector<8x16xf32>
    %21 = arith.maximumf %19, %20 : vector<8x16xf32>
    %cst_18 = arith.constant dense<0xFF800000> : vector<8xf32>
    %22 = vector.multi_reduction <maximumf>, %21, %cst_18 [1] : vector<8x16xf32> to vector<8xf32>
    %23 = vector.shape_cast %22 : vector<8xf32> to vector<8x1xf32>
    %24 = vector.broadcast %23 : vector<8x1xf32> to vector<8x16xf32>
    %25 = arith.subf %21, %24 : vector<8x16xf32>
    %26 = math.exp %25 : vector<8x16xf32>
    %cst_19 = arith.constant dense<0.000000e+00> : vector<8xf32>
    %27 = vector.multi_reduction <add>, %26, %cst_19 [1] : vector<8x16xf32> to vector<8xf32>
    %28 = vector.shape_cast %27 : vector<8xf32> to vector<8x1xf32>
    %cst_20 = arith.constant 1.000000e+00 : f32
    %29 = vector.broadcast %cst_20 : f32 to vector<8x1xf32>
    %30 = arith.divf %29, %28 : vector<8x1xf32>
    %31 = vector.broadcast %30 : vector<8x1xf32> to vector<8x16xf32>
    %32 = arith.mulf %26, %31 : vector<8x16xf32>
    %c0_21 = arith.constant 0 : index
    %c0_22 = arith.constant 0 : index
    %33 = vector.load %arg8[%c0_21, %c0_22] : memref<8x16xf32, #tpu.memory_space<vmem>>, vector<8x16xf32>
    tpu.vector_store %arg8[%c0_21, %c0_22], %32 {strides = array<i32>} : memref<8x16xf32, #tpu.memory_space<vmem>>, vector<8x16xf32>,
    return
  }
  func.func @transform_0(%arg0: i32) -> (i32, i32) {
    %c0_i32 = arith.constant 0 : i32
    %c0_i32_0 = arith.constant 0 : i32
    return %arg0, %c0_i32 : i32, i32
  }
  func.func @transform_1(%arg0: i32) -> (i32, i32) {
    %c0_i32 = arith.constant 0 : i32
    %c0_i32_0 = arith.constant 0 : i32
    %c0_i32_1 = arith.constant 0 : i32
    return %c0_i32, %c0_i32_0 : i32, i32
  }
  func.func @transform_2(%arg0: i32) -> (i32, i32) {
    %c0_i32 = arith.constant 0 : i32
    %c0_i32_0 = arith.constant 0 : i32
    %c0_i32_1 = arith.constant 0 : i32
    return %c0_i32, %c0_i32_0 : i32, i32
  }
  func.func @transform_3(%arg0: i32) -> (i32, i32) {
    %c0_i32 = arith.constant 0 : i32
    %c0_i32_0 = arith.constant 0 : i32
    %c0_i32_1 = arith.constant 0 : i32
    return %c0_i32, %c0_i32_0 : i32, i32
  }
  func.func @transform_4(%arg0: i32) -> (i32, i32) {
    %c0_i32 = arith.constant 0 : i32
    %c0_i32_0 = arith.constant 0 : i32
    %c0_i32_1 = arith.constant 0 : i32
    return %c0_i32, %c0_i32_0 : i32, i32
  }
  func.func @transform_5(%arg0: i32) -> (i32, i32) {
    %c0_i32 = arith.constant 0 : i32
    %c0_i32_0 = arith.constant 0 : i32
    %c0_i32_1 = arith.constant 0 : i32
    return %c0_i32, %c0_i32_0 : i32, i32
  }
  func.func @transform_6(%arg0: i32) -> (i32, i32) {
    %c0_i32 = arith.constant 0 : i32
    %c0_i32_0 = arith.constant 0 : i32
    %c0_i32_1 = arith.constant 0 : i32
    return %c0_i32, %c0_i32_0 : i32, i32
  }
  func.func @transform_7(%arg0: i32) -> (i32, i32) {
    %c0_i32 = arith.constant 0 : i32
    %c0_i32_0 = arith.constant 0 : i32
    return %arg0, %c0_i32 : i32, i32
  }
}

</mosaic_0001>

<llo_original>
// kernel: mlp_forward.1
$region0: #{mlp_forward.1}
  #allocation0 [shape = 'u32[]', space=smem, size = 0x4, offset = 0x4, fixed_abs, tag = 'smem constant byte address 0x4 - core index']
  #allocation1 [shape = 'u32[144,128]{1,0:T(1,128)}', space=vmem, size = 0x12000, scoped, tag = 'internal scratch']
  %s0 = inlined_call_operand.vmem [shape: f32[8,64], index: 0, kind: input, shape index: {}]
  %s1 = inlined_call_operand.vmem [shape: f32[64,256], index: 1, kind: input, shape index: {}]
  %s2 = inlined_call_operand.vmem [shape: f32[1,256], index: 2, kind: input, shape index: {}]
  %s3 = inlined_call_operand.vmem [shape: f32[256,32], index: 3, kind: input, shape index: {}]
  %s4 = inlined_call_operand.vmem [shape: f32[1,32], index: 4, kind: input, shape index: {}]
  %s5 = inlined_call_operand.vmem [shape: f32[32,16], index: 5, kind: input, shape index: {}]
  %s6 = inlined_call_operand.vmem [shape: f32[1,16], index: 6, kind: input, shape index: {}]
  %s7 = inlined_call_operand.hbm [shape: f32[8,16], index: 7, kind: output, shape index: {}]
  %s8 = sld [smem:[#allocation0]]
  $region38: #{mlp_forward.1} parent=0
    _
  %s10 = ssub.s32 1, %s8
  %s11 = scalar_select 0, %s10, %s8
  $region1: #{mlp_forward.1} parent=0
    #allocation2 [shape = 'u8[4096]{0}', space=vmem, size = 0x1000, scoped, tag = 'output window, operand 0, single buffered']
    #allocation3 [shape = 's32[1]{0}', space=sflag, size = 0x4, scoped, tag = 'scoped memory for mlp_forward.1']
    %12 = vsyncpa [#allocation3], 0
    // Predicated region
    $region2: #{mlp_forward.1} parent=1 // pred_check
      _
    $region3: #{mlp_forward.1} parent=1 // pred_check_branch
      %14 = sbr.rel (0) target = $region5
    $region4: #{mlp_forward.1} parent=1 // pred_region
      _
    $region5: #{mlp_forward.1} parent=1 // pred_fallthru
      _
    // Predicated region
    $region6: #{mlp_forward.1} parent=1 // pred_check
      _
    $region7: #{mlp_forward.1} parent=1 // pred_check_branch
      %16 = sbr.rel (0) target = $region9
    $region8: #{mlp_forward.1} parent=1 // pred_region
      _
    $region9: #{mlp_forward.1} parent=1 // pred_fallthru
      _
    // Predicated region
    $region10: #{mlp_forward.1} parent=1 // pred_check
      _
    $region11: #{mlp_forward.1} parent=1 // pred_check_branch
      %18 = sbr.rel (0) target = $region13
    $region12: #{mlp_forward.1} parent=1 // pred_region
      _
    $region13: #{mlp_forward.1} parent=1 // pred_fallthru
      _
    // Predicated region
    $region14: #{mlp_forward.1} parent=1 // pred_check
      _
    $region15: #{mlp_forward.1} parent=1 // pred_check_branch
      %20 = sbr.rel (0) target = $region17
    $region16: #{mlp_forward.1} parent=1 // pred_region
      _
    $region17: #{mlp_forward.1} parent=1 // pred_fallthru
      _
    // Predicated region
    $region18: #{mlp_forward.1} parent=1 // pred_check
      _
    $region19: #{mlp_forward.1} parent=1 // pred_check_branch
      %22 = sbr.rel (0) target = $region21
    $region20: #{mlp_forward.1} parent=1 // pred_region
      _
    $region21: #{mlp_forward.1} parent=1 // pred_fallthru
      _
    // Predicated region
    $region22: #{mlp_forward.1} parent=1 // pred_check
      _
    $region23: #{mlp_forward.1} parent=1 // pred_check_branch
      %24 = sbr.rel (0) target = $region25
    $region24: #{mlp_forward.1} parent=1 // pred_region
      _
    $region25: #{mlp_forward.1} parent=1 // pred_fallthru
      _
    // Predicated region
    $region26: #{mlp_forward.1} parent=1 // pred_check
      _
    $region27: #{mlp_forward.1} parent=1 // pred_check_branch
      %26 = sbr.rel (0) target = $region29
    $region28: #{mlp_forward.1} parent=1 // pred_region
      _
    $region29: #{mlp_forward.1} parent=1 // pred_fallthru
      _
    %v27 = vld [vmem:[%s0] sm:$0xff]
    %v28 = vld [vmem:[%s1] sm:$0xff]
    %v29 = vld [vmem:[%s1 + $0x8] sm:$0xff]
    %v30 = vld [vmem:[%s1 + $0x10] sm:$0xff]
    %v31 = vld [vmem:[%s1 + $0x18] sm:$0xff]
    %v32 = vld [vmem:[%s1 + $0x20] sm:$0xff]
    %v33 = vld [vmem:[%s1 + $0x28] sm:$0xff]
    %v34 = vld [vmem:[%s1 + $0x30] sm:$0xff]
    %v35 = vld [vmem:[%s1 + $0x38] sm:$0xff]
    %v36 = vld [vmem:[%s1 + $0x40] sm:$0xff]
    %v37 = vld [vmem:[%s1 + $0x48] sm:$0xff]
    %v38 = vld [vmem:[%s1 + $0x50] sm:$0xff]
    %v39 = vld [vmem:[%s1 + $0x58] sm:$0xff]
    %v40 = vld [vmem:[%s1 + $0x60] sm:$0xff]
    %v41 = vld [vmem:[%s1 + $0x68] sm:$0xff]
    %v42 = vld [vmem:[%s1 + $0x70] sm:$0xff]
    %v43 = vld [vmem:[%s1 + $0x78] sm:$0xff]
    %v44 = vld [vmem:[%s2] sm:$0x3]
    %v46 = vlaneseq
    %v47 = vshrl.u32 %v46, 7
    %v48 = vsub.s32 0, %v47
    %v49 = vrot.slane %v44, %v48
    %v50 = vlaneseq
    %v51 = vshrl.u32 %v50, 7
    %v52 = vsub.s32 1, %v51
    %v53 = vrot.slane %v44, %v52
    %vm56 = vcmask 523264
    %v58 = vsel %vm56, %v27, 0
    %60 = vmatprep.subr.mxu0 %v29
    %61 = vmatpush1.msra.mxu0 %v28
    %62 = vmatprep.subr.mxu0 %v31
    %63 = vmatpush1.msra.mxu0 %v30
    %64 = vmatprep.subr.mxu0 %v33
    %65 = vmatpush1.msra.mxu0 %v32
    %66 = vmatprep.subr.mxu0 %v35
    %67 = vmatpush1.msra.mxu0 %v34
    %68 = vmatprep.subr.mxu0 %v37
    %69 = vmatpush1.msra.mxu0 %v36
    %70 = vmatprep.subr.mxu0 %v39
    %71 = vmatpush1.msra.mxu0 %v38
    %72 = vmatprep.subr.mxu0 %v41
    %73 = vmatpush1.msra.mxu0 %v40
    %74 = vmatprep.subr.mxu0 %v43
    %75 = vmatpush1.msra.mxu0 %v42
    %76 = vmatprep.subr.mxu0 0.0
    %77 = vmatpush1.msra.mxu0 0.0
    %78 = vmatprep.subr.mxu0 0.0
    %79 = vmatpush1.msra.mxu0 0.0
    %80 = vmatprep.subr.mxu0 0.0
    %81 = vmatpush1.msra.mxu0 0.0
    %82 = vmatprep.subr.mxu0 0.0
    %83 = vmatpush1.msra.mxu0 0.0
    %84 = vmatprep.subr.mxu0 0.0
    %85 = vmatpush1.msra.mxu0 0.0
    %86 = vmatprep.subr.mxu0 0.0
    %87 = vmatpush1.msra.mxu0 0.0
    %88 = vmatprep.subr.mxu0 0.0
    %89 = vmatpush1.msra.mxu0 0.0
    %90 = vmatprep.subr.mxu0 0.0
    %91 = vmatpush1.msra.mxu0 0.0
    %92 = vmatprep.subr.mxu0 0.0
    %93 = vmatpush1.msra.mxu0 0.0
    %94 = vmatprep.subr.mxu0 0.0
    %95 = vmatpush1.msra.mxu0 0.0
    %96 = vmatprep.subr.mxu0 0.0
    %97 = vmatpush1.msra.mxu0 0.0
    %98 = vmatprep.subr.mxu0 0.0
    %99 = vmatpush1.msra.mxu0 0.0
    %100 = vmatprep.subr.mxu0 0.0
    %101 = vmatpush1.msra.mxu0 0.0
    %102 = vmatprep.subr.mxu0 0.0
    %103 = vmatpush1.msra.mxu0 0.0
    %104 = vmatprep.subr.mxu0 0.0
    %105 = vmatpush1.msra.mxu0 0.0
    %106 = vmatprep.subr.mxu0 0.0
    %107 = vmatpush1.msra.mxu0 0.0
    %108 = vmatprep.subr.mxu0 0.0
    %109 = vmatpush1.msra.mxu0 0.0
    %110 = vmatprep.subr.mxu0 0.0
    %111 = vmatpush1.msra.mxu0 0.0
    %112 = vmatprep.subr.mxu0 0.0
    %113 = vmatpush1.msra.mxu0 0.0
    %114 = vmatprep.subr.mxu0 0.0
    %115 = vmatpush1.msra.mxu0 0.0
    %116 = vmatprep.subr.mxu0 0.0
    %117 = vmatpush1.msra.mxu0 0.0
    %118 = vmatprep.subr.mxu0 0.0
    %119 = vmatpush1.msra.mxu0 0.0
    %120 = vmatprep.subr.mxu0 0.0
    %121 = vmatpush1.msra.mxu0 0.0
    %122 = vmatprep.subr.mxu0 0.0
    %123 = vmatpush1.msra.mxu0 0.0
    %124 = vmatprep.mubr.f32.mxu0 0.0
    %125 = vmatmul.mubr.f32.gmra.mrb[0].mxu0 %v58
    %v126 = vpop.f32.mrb[0].mxu0
    %v127 = vadd.f32 %v49, %v126
    %v128 = vpop.f32.mrb[0].mxu0
    %v129 = vadd.f32 %v53, %v128
    %130 = vdwg.mxu0
    %v131 = vmax.f32 %v127, 0.0
    %v132 = vmax.f32 %v129, 0.0
    %v133 = vld [vmem:[%s3] sm:$0xff]
    %v134 = vld [vmem:[%s3 + $0x8] sm:$0xff]
    %v135 = vld [vmem:[%s3 + $0x10] sm:$0xff]
    %v136 = vld [vmem:[%s3 + $0x18] sm:$0xff]
    %v137 = vld [vmem:[%s3 + $0x20] sm:$0xff]
    %v138 = vld [vmem:[%s3 + $0x28] sm:$0xff]
    %v139 = vld [vmem:[%s3 + $0x30] sm:$0xff]
    %v140 = vld [vmem:[%s3 + $0x38] sm:$0xff]
    %v141 = vld [vmem:[%s3 + $0x40] sm:$0xff]
    %v142 = vld [vmem:[%s3 + $0x48] sm:$0xff]
    %v143 = vld [vmem:[%s3 + $0x50] sm:$0xff]
    %v144 = vld [vmem:[%s3 + $0x58] sm:$0xff]
    %v145 = vld [vmem:[%s3 + $0x60] sm:$0xff]
    %v146 = vld [vmem:[%s3 + $0x68] sm:$0xff]
    %v147 = vld [vmem:[%s3 + $0x70] sm:$0xff]
    %v148 = vld [vmem:[%s3 + $0x78] sm:$0xff]
    %v149 = vld [vmem:[%s3 + $0x80] sm:$0xff]
    %v150 = vld [vmem:[%s3 + $0x88] sm:$0xff]
    %v151 = vld [vmem:[%s3 + $0x90] sm:$0xff]
    %v152 = vld [vmem:[%s3 + $0x98] sm:$0xff]
    %v153 = vld [vmem:[%s3 + $0xa0] sm:$0xff]
    %v154 = vld [vmem:[%s3 + $0xa8] sm:$0xff]
    %v155 = vld [vmem:[%s3 + $0xb0] sm:$0xff]
    %v156 = vld [vmem:[%s3 + $0xb8] sm:$0xff]
    %v157 = vld [vmem:[%s3 + $0xc0] sm:$0xff]
    %v158 = vld [vmem:[%s3 + $0xc8] sm:$0xff]
    %v159 = vld [vmem:[%s3 + $0xd0] sm:$0xff]
    %v160 = vld [vmem:[%s3 + $0xd8] sm:$0xff]
    %v161 = vld [vmem:[%s3 + $0xe0] sm:$0xff]
    %v162 = vld [vmem:[%s3 + $0xe8] sm:$0xff]
    %v163 = vld [vmem:[%s3 + $0xf0] sm:$0xff]
    %v164 = vld [vmem:[%s3 + $0xf8] sm:$0xff]
    %v165 = vld [vmem:[%s4] sm:$0x1]
    %v167 = vlaneseq
    %v168 = vshrl.u32 %v167, 7
    %v169 = vsub.s32 0, %v168
    %v170 = vrot.slane %v165, %v169
    %172 = vmatprep.subr.mxu0 0.0
    %173 = vmatpush1.msra.mxu0 %v133
    %174 = vmatprep.subr.mxu0 0.0
    %175 = vmatpush1.msra.mxu0 %v134
    %176 = vmatprep.subr.mxu0 0.0
    %177 = vmatpush1.msra.mxu0 %v135
    %178 = vmatprep.subr.mxu0 0.0
    %179 = vmatpush1.msra.mxu0 %v136
    %180 = vmatprep.subr.mxu0 0.0
    %181 = vmatpush1.msra.mxu0 %v137
    %182 = vmatprep.subr.mxu0 0.0
    %183 = vmatpush1.msra.mxu0 %v138
    %184 = vmatprep.subr.mxu0 0.0
    %185 = vmatpush1.msra.mxu0 %v139
    %186 = vmatprep.subr.mxu0 0.0
    %187 = vmatpush1.msra.mxu0 %v140
    %188 = vmatprep.subr.mxu0 0.0
    %189 = vmatpush1.msra.mxu0 %v141
    %190 = vmatprep.subr.mxu0 0.0
    %191 = vmatpush1.msra.mxu0 %v142
    %192 = vmatprep.subr.mxu0 0.0
    %193 = vmatpush1.msra.mxu0 %v143
    %194 = vmatprep.subr.mxu0 0.0
    %195 = vmatpush1.msra.mxu0 %v144
    %196 = vmatprep.subr.mxu0 0.0
    %197 = vmatpush1.msra.mxu0 %v145
    %198 = vmatprep.subr.mxu0 0.0
    %199 = vmatpush1.msra.mxu0 %v146
    %200 = vmatprep.subr.mxu0 0.0
    %201 = vmatpush1.msra.mxu0 %v147
    %202 = vmatprep.subr.mxu0 0.0
    %203 = vmatpush1.msra.mxu0 %v148
    %204 = vmatprep.subr.mxu0 0.0
    %205 = vmatpush1.msra.mxu0 %v149
    %206 = vmatprep.subr.mxu0 0.0
    %207 = vmatpush1.msra.mxu0 %v150
    %208 = vmatprep.subr.mxu0 0.0
    %209 = vmatpush1.msra.mxu0 %v151
    %210 = vmatprep.subr.mxu0 0.0
    %211 = vmatpush1.msra.mxu0 %v152
    %212 = vmatprep.subr.mxu0 0.0
    %213 = vmatpush1.msra.mxu0 %v153
    %214 = vmatprep.subr.mxu0 0.0
    %215 = vmatpush1.msra.mxu0 %v154
    %216 = vmatprep.subr.mxu0 0.0
    %217 = vmatpush1.msra.mxu0 %v155
    %218 = vmatprep.subr.mxu0 0.0
    %219 = vmatpush1.msra.mxu0 %v156
    %220 = vmatprep.subr.mxu0 0.0
    %221 = vmatpush1.msra.mxu0 %v157
    %222 = vmatprep.subr.mxu0 0.0
    %223 = vmatpush1.msra.mxu0 %v158
    %224 = vmatprep.subr.mxu0 0.0
    %225 = vmatpush1.msra.mxu0 %v159
    %226 = vmatprep.subr.mxu0 0.0
    %227 = vmatpush1.msra.mxu0 %v160
    %228 = vmatprep.subr.mxu0 0.0
    %229 = vmatpush1.msra.mxu0 %v161
    %230 = vmatprep.subr.mxu0 0.0
    %231 = vmatpush1.msra.mxu0 %v162
    %232 = vmatprep.subr.mxu0 0.0
    %233 = vmatpush1.msra.mxu0 %v163
    %234 = vmatprep.subr.mxu0 0.0
    %235 = vmatpush1.msra.mxu0 %v164
    %236 = vmatprep.mubr.f32.mxu0 %v132
    %237 = vmatmul.mubr.f32.gmra.mrb[0].mxu0 %v131
    %v238 = vpop.f32.mrb[0].mxu0
    %v239 = vadd.f32 %v170, %v238
    %v240 = vpop.f32.mrb[0].mxu0
    %241 = vdwg.mxu0
    %v242 = vmax.f32 %v239, 0.0
    %v243 = vld [vmem:[%s5] sm:$0xff]
    %v244 = vld [vmem:[%s5 + $0x8] sm:$0xff]
    %v245 = vld [vmem:[%s5 + $0x10] sm:$0xff]
    %v246 = vld [vmem:[%s5 + $0x18] sm:$0xff]
    %v247 = vld [vmem:[%s6] sm:$0x1]
    %v249 = vlaneseq
    %v250 = vshrl.u32 %v249, 7
    %v251 = vsub.s32 0, %v250
    %v252 = vrot.slane %v247, %v251
    %vm254 = vcmask 261120
    %v256 = vsel %vm254, %v242, 0
    %258 = vmatprep.subr.mxu0 0.0
    %259 = vmatpush1.msra.mxu0 %v243
    %260 = vmatprep.subr.mxu0 0.0
    %261 = vmatpush1.msra.mxu0 %v244
    %262 = vmatprep.subr.mxu0 0.0
    %263 = vmatpush1.msra.mxu0 %v245
    %264 = vmatprep.subr.mxu0 0.0
    %265 = vmatpush1.msra.mxu0 %v246
    %266 = vmatprep.subr.mxu0 0.0
    %267 = vmatpush1.msra.mxu0 0.0
    %268 = vmatprep.subr.mxu0 0.0
    %269 = vmatpush1.msra.mxu0 0.0
    %270 = vmatprep.subr.mxu0 0.0
    %271 = vmatpush1.msra.mxu0 0.0
    %272 = vmatprep.subr.mxu0 0.0
    %273 = vmatpush1.msra.mxu0 0.0
    %274 = vmatprep.subr.mxu0 0.0
    %275 = vmatpush1.msra.mxu0 0.0
    %276 = vmatprep.subr.mxu0 0.0
    %277 = vmatpush1.msra.mxu0 0.0
    %278 = vmatprep.subr.mxu0 0.0
    %279 = vmatpush1.msra.mxu0 0.0
    %280 = vmatprep.subr.mxu0 0.0
    %281 = vmatpush1.msra.mxu0 0.0
    %282 = vmatprep.subr.mxu0 0.0
    %283 = vmatpush1.msra.mxu0 0.0
    %284 = vmatprep.subr.mxu0 0.0
    %285 = vmatpush1.msra.mxu0 0.0
    %286 = vmatprep.subr.mxu0 0.0
    %287 = vmatpush1.msra.mxu0 0.0
    %288 = vmatprep.subr.mxu0 0.0
    %289 = vmatpush1.msra.mxu0 0.0
    %290 = vmatprep.subr.mxu0 0.0
    %291 = vmatpush1.msra.mxu0 0.0
    %292 = vmatprep.subr.mxu0 0.0
    %293 = vmatpush1.msra.mxu0 0.0
    %294 = vmatprep.subr.mxu0 0.0
    %295 = vmatpush1.msra.mxu0 0.0
    %296 = vmatprep.subr.mxu0 0.0
    %297 = vmatpush1.msra.mxu0 0.0
    %298 = vmatprep.subr.mxu0 0.0
    %299 = vmatpush1.msra.mxu0 0.0
    %300 = vmatprep.subr.mxu0 0.0
    %301 = vmatpush1.msra.mxu0 0.0
    %302 = vmatprep.subr.mxu0 0.0
    %303 = vmatpush1.msra.mxu0 0.0
    %304 = vmatprep.subr.mxu0 0.0
    %305 = vmatpush1.msra.mxu0 0.0
    %306 = vmatprep.subr.mxu0 0.0
    %307 = vmatpush1.msra.mxu0 0.0
    %308 = vmatprep.subr.mxu0 0.0
    %309 = vmatpush1.msra.mxu0 0.0
    %310 = vmatprep.subr.mxu0 0.0
    %311 = vmatpush1.msra.mxu0 0.0
    %312 = vmatprep.subr.mxu0 0.0
    %313 = vmatpush1.msra.mxu0 0.0
    %314 = vmatprep.subr.mxu0 0.0
    %315 = vmatpush1.msra.mxu0 0.0
    %316 = vmatprep.subr.mxu0 0.0
    %317 = vmatpush1.msra.mxu0 0.0
    %318 = vmatprep.subr.mxu0 0.0
    %319 = vmatpush1.msra.mxu0 0.0
    %320 = vmatprep.subr.mxu0 0.0
    %321 = vmatpush1.msra.mxu0 0.0
    %322 = vmatprep.mubr.f32.mxu0 0.0
    %323 = vmatmul.mubr.f32.gmra.mrb[0].mxu0 %v256
    %v324 = vpop.f32.mrb[0].mxu0
    %v325 = vadd.f32 %v252, %v324
    %v326 = vpop.f32.mrb[0].mxu0
    %327 = vdwg.mxu0
    %v328 = vmax.f32 %v325, 0.0
    %vm329 = vcmask 130048
    %v330 = vsel %vm329, %v328, -inf
    %331 = vmax.xlane.f32.xlu0 %v330
    %v332 = vpop.xlane.xlu0 %331
    %v333 = vsub.f32 %v328, %v332
    %v334 = vmul.f32 %v333, 1.442695
    %v335 = vpow.pop %v334
    %v336 = vsel %vm329, %v335, 0.0
    %337 = vadd.xlane.f32.xlu0 %v336
    %v338 = vpop.xlane.xlu0 %337
    %v339 = vrcp.pop %v338
    %v340 = vmul.f32 1.0, %v339
    %v341 = vmul.f32 %v335, %v340
    %342 = vst.msk [vmem:[#allocation2] sm:$0xff] %vm329, %v341
    // Predicated region
    $region30: #{mlp_forward.1} parent=1 // pred_check
      _
    $region31: #{mlp_forward.1} parent=1 // pred_check_branch
      %344 = sbr.rel (0) target = $region33
    $region32: #{mlp_forward.1} parent=1 // pred_region
      %s346 = ssub.s32 128, 128
      %347 = vsyncadd [#allocation3], %s346
      %s349 = sshll.u32 [#allocation2], 4
      %s350 = int_to_ptr.vmem [resolvable:$true] %s349
      %352 = dma.vmem_to_hbm [thread:$0]  %s350, 128, %s7, [#allocation3]
    $region33: #{mlp_forward.1} parent=1 // pred_fallthru
      _
    // Predicated region
    $region34: #{mlp_forward.1} parent=1 // pred_check
      _
    $region35: #{mlp_forward.1} parent=1 // pred_check_branch
      %354 = sbr.rel (0) target = $region37
    $region36: #{mlp_forward.1} parent=1 // pred_region
      %355 = dma.done [#allocation3], 128
    $region37: #{mlp_forward.1} parent=1 // pred_fallthru
      _
    %356 = vsyncpa [#allocation3], 1

</llo_original>
